<compile_context>
chip_gen: v7x
topology: tpu7x:2x2x1
jax: 0.10.0
libtpu: 0.0.40
codegen_flags: <defaults>
</compile_context>

<pallas_src>
import functools

import jax
import jax.numpy as jnp
from jax.experimental import pallas as pl
from jax.experimental.pallas import tpu as pltpu


def _conv_tile(x_ref, w_ref, W):
    """One conv tile: (th, W+2, 3*Cin) bf16 -> (th*W, Cp) f32 via a single matmul."""
    xt = x_ref[...]                                   # (th, W+2, 3*Cin) bf16
    th = xt.shape[0]
    # Fold the 3 column taps into the contraction dim -> (th, W, 9*Cin).
    cols = jnp.concatenate(
        [xt[:, 0:W, :], xt[:, 1:W + 1, :], xt[:, 2:W + 2, :]], axis=-1)
    lhs = cols.reshape(th * W, cols.shape[-1])        # (th*W, 9*Cin) bf16
    # Single MXU matmul, K = 9*Cin, f32 accumulation.
    return jnp.dot(lhs, w_ref[...], preferred_element_type=jnp.float32)


def _conv_stats_kernel(x_ref, w_ref, sum_ref, ssq_ref, *, W):
    """Pass 1: conv per tile, accumulate per-channel sum / sum-of-squares."""
    @pl.when(pl.program_id(0) == 0)
    def _():
        sum_ref[...] = jnp.zeros_like(sum_ref)
        ssq_ref[...] = jnp.zeros_like(ssq_ref)

    conv = _conv_tile(x_ref, w_ref, W)                # (th*W, Cp) f32
    sum_ref[...] += jnp.sum(conv, axis=0, keepdims=True)
    ssq_ref[...] += jnp.sum(conv * conv, axis=0, keepdims=True)


def _conv_norm_relu_kernel(x_ref, w_ref, scale_ref, shift_ref, o_ref, *, W):
    """Pass 2: conv per tile (recompute), affine BN + ReLU, lane-dense store."""
    conv = _conv_tile(x_ref, w_ref, W)                # (th*W, Cp) f32
    y = conv * scale_ref[...] + shift_ref[...]
    o_ref[...] = jnp.maximum(y, 0.0).astype(o_ref.dtype)


def _pick_row_tile(nh, w, target_rows):
    """Largest divisor th of nh with th*w <= target (and 8-aligned tile rows)."""
    cands = [th for th in range(1, nh + 1)
             if nh % th == 0 and (th * w) % 8 == 0 and th * w <= max(target_rows, w)]
    return max(cands) if cands else nh


def conv_bn_relu(x_nchw, w_hwio, bias, gamma, beta, eps=1e-5,
                 block_rows_target=512):
    """x_nchw: (N, Cin, H, W) f32.  w_hwio: (3, 3, Cin, Cout).  Returns NCHW f32."""
    del bias  # additive conv bias cancels exactly under training-mode BatchNorm
    N, Cin, H, W = x_nchw.shape
    assert w_hwio.shape[:3] == (3, 3, Cin)
    Cout = w_hwio.shape[-1]
    NH, M = N * H, N * H * W
    Cp = max(128, ((Cout + 127) // 128) * 128)        # lane-dense padded channels
    th = _pick_row_tile(NH, W, block_rows_target)     # image rows per grid step
    grid = (NH // th,)

    # ---- glue: NCHW -> padded NHWC (bf16); fold the 3 row taps into channels ----
    x = jnp.transpose(x_nchw, (0, 2, 3, 1)).astype(jnp.bfloat16)      # N H W Cin
    xp = jnp.pad(x, ((0, 0), (1, 1), (1, 1), (0, 0)))                 # N H+2 W+2 Cin
    x_rows = jnp.concatenate([xp[:, 0:H], xp[:, 1:H + 1], xp[:, 2:H + 2]],
                             axis=-1).reshape(NH, W + 2, 3 * Cin)     # NH W+2 3Cin

    # weight -> (9*Cin, Cp); K ordering (kw, kh, cin) matches the kernel's fold.
    w_mat = jnp.transpose(w_hwio, (1, 0, 2, 3)).reshape(9 * Cin, Cout)
    w_mat = jnp.pad(w_mat, ((0, 0), (0, Cp - Cout))).astype(jnp.bfloat16)

    x_spec = pl.BlockSpec((th, W + 2, 3 * Cin), lambda i: (i, 0, 0))
    w_spec = pl.BlockSpec((9 * Cin, Cp), lambda i: (0, 0))     # VMEM-resident
    vec_spec = pl.BlockSpec((1, Cp), lambda i: (0, 0))         # VMEM-resident

    # ---- pass 1: conv tiles -> global per-channel sum / sum-of-squares ----
    s, ssq = pl.pallas_call(
        functools.partial(_conv_stats_kernel, W=W),
        grid=grid,
        in_specs=[x_spec, w_spec],
        out_specs=(vec_spec, vec_spec),
        out_shape=(jax.ShapeDtypeStruct((1, Cp), jnp.float32),
                   jax.ShapeDtypeStruct((1, Cp), jnp.float32)),
        compiler_params=pltpu.CompilerParams(
            dimension_semantics=("arbitrary",),        # resident accumulator axis
            vmem_limit_bytes=32 * 1024 * 1024),
    )(x_rows, w_mat)

    # ---- glue: O(Cout) BN finalize, folded into a single scale/shift ----
    gamma_p = jnp.pad(gamma.astype(jnp.float32), (0, Cp - Cout)).reshape(1, Cp)
    beta_p = jnp.pad(beta.astype(jnp.float32), (0, Cp - Cout)).reshape(1, Cp)
    mean = s / float(M)
    var = jnp.maximum(ssq / float(M) - mean * mean, 0.0)       # biased variance
    scale = gamma_p * jax.lax.rsqrt(var + eps)
    shift = beta_p - mean * scale

    # ---- pass 2: conv again + affine + ReLU, lane-dense (M, Cp) output ----
    out_flat = pl.pallas_call(
        functools.partial(_conv_norm_relu_kernel, W=W),
        grid=grid,
        in_specs=[x_spec, w_spec, vec_spec, vec_spec],
        out_specs=pl.BlockSpec((th * W, Cp), lambda i: (i, 0)),
        out_shape=jax.ShapeDtypeStruct((M, Cp), jnp.float32),
        compiler_params=pltpu.CompilerParams(
            dimension_semantics=("parallel",),          # independent tiles
            vmem_limit_bytes=32 * 1024 * 1024),
    )(x_rows, w_mat, scale, shift)

    # ---- glue: drop channel padding, back to PyTorch NCHW ----
    out = out_flat[:, :Cout].reshape(N, H, W, Cout)
    return jnp.transpose(out, (0, 3, 1, 2))


if __name__ == "__main__":
    N, Cin, Cout, H, W = 2, 4, 8, 16, 16
    key = jax.random.PRNGKey(0)
    k_x, k_w, k_b, k_g, k_be = jax.random.split(key, 5)

    x = jax.random.normal(k_x, (N, Cin, H, W), jnp.float32)
    w = jax.random.normal(k_w, (3, 3, Cin, Cout), jnp.float32) * 0.1   # HWIO
    b = jax.random.normal(k_b, (Cout,), jnp.float32) * 0.1
    gamma = 1.0 + 0.1 * jax.random.normal(k_g, (Cout,), jnp.float32)
    beta = 0.1 * jax.random.normal(k_be, (Cout,), jnp.float32)

    # Small target so the demo exercises a multi-step grid (4 tiles) and the
    # cross-tile stats accumulation path.
    out = conv_bn_relu(x, w, b, gamma, beta, block_rows_target=128)
    out = jax.block_until_ready(out)

    # Pure-JAX reference with the same bf16 input/weight rounding but f32 math.
    xb = x.astype(jnp.bfloat16).astype(jnp.float32)
    wb = w.astype(jnp.bfloat16).astype(jnp.float32)
    x_nhwc = jnp.transpose(xb, (0, 2, 3, 1))
    conv = jax.lax.conv_general_dilated(
        x_nhwc, wb, window_strides=(1, 1), padding="SAME",
        dimension_numbers=("NHWC", "HWIO", "NHWC"),
    ) + b   # reference keeps the conv bias; it must cancel under training BN
    mean = conv.mean(axis=(0, 1, 2), keepdims=True)
    var = ((conv - mean) ** 2).mean(axis=(0, 1, 2), keepdims=True)
    ref = jnp.maximum((conv - mean) * jax.lax.rsqrt(var + 1e-5) * gamma + beta, 0.0)
    ref = jnp.transpose(ref, (0, 3, 1, 2))

    assert out.shape == (N, Cout, H, W)
    assert jnp.allclose(out, ref, atol=1e-3, rtol=1e-3), "mismatch vs reference"

    print("KERNEL_OK")
</pallas_src>

<mosaic_0001>
module attributes {stable_mosaic.version = 11 : i64} {
  func.func @_conv_stats_kernel(%arg0: i32, %arg1: memref<8x18x12xbf16, #tpu.memory_space<vmem>>, %arg2: memref<36x128xbf16, #tpu.memory_space<vmem>>, %arg3: memref<1x128xf32, #tpu.memory_space<vmem>>, %arg4: memref<1x128xf32, #tpu.memory_space<vmem>>) attributes {dimension_semantics = [#tpu.dimension_semantics<arbitrary>], iteration_bounds = array<i64: 4>, scalar_prefetch = 0 : i64, scratch_operands = 0 : i64, tpu.core_type = #tpu.core_type<tc>, window_params = [{transform_indices = @transform_0, window_bounds = array<i64: 8, 18, 12>}, {pipeline_mode = #tpu.pipeline_mode<synchronous>, transform_indices = @transform_1, window_bounds = array<i64: 36, 128>}, {pipeline_mode = #tpu.pipeline_mode<synchronous>, transform_indices = @transform_2, window_bounds = array<i64: 1, 128>}, {pipeline_mode = #tpu.pipeline_mode<synchronous>, transform_indices = @transform_3, window_bounds = array<i64: 1, 128>}]} {
    %c0_i32 = arith.constant 0 : i32
    %0 = arith.cmpi eq, %arg0, %c0_i32 : i32
    %1 = arith.extui %0 : i1 to i32
    %c0_i32_0 = arith.constant 0 : i32
    %2 = arith.cmpi ne, %1, %c0_i32_0 : i32
    scf.if %2 {
      %cst_15 = arith.constant 0.000000e+00 : f32
      %22 = vector.broadcast %cst_15 : f32 to vector<1x128xf32>
      %c0_16 = arith.constant 0 : index
      %c0_17 = arith.constant 0 : index
      %23 = vector.load %arg3[%c0_16, %c0_17] : memref<1x128xf32, #tpu.memory_space<vmem>>, vector<1x128xf32>
      tpu.vector_store %arg3[%c0_16, %c0_17], %22 {strides = array<i32>} : memref<1x128xf32, #tpu.memory_space<vmem>>, vector<1x128xf32>,
      %cst_18 = arith.constant 0.000000e+00 : f32
      %24 = vector.broadcast %cst_18 : f32 to vector<1x128xf32>
      %c0_19 = arith.constant 0 : index
      %c0_20 = arith.constant 0 : index
      %25 = vector.load %arg4[%c0_19, %c0_20] : memref<1x128xf32, #tpu.memory_space<vmem>>, vector<1x128xf32>
      tpu.vector_store %arg4[%c0_19, %c0_20], %24 {strides = array<i32>} : memref<1x128xf32, #tpu.memory_space<vmem>>, vector<1x128xf32>,
    } else {
    }
    %c0 = arith.constant 0 : index
    %c0_1 = arith.constant 0 : index
    %c0_2 = arith.constant 0 : index
    %3 = vector.load %arg1[%c0, %c0_1, %c0_2] : memref<8x18x12xbf16, #tpu.memory_space<vmem>>, vector<8x18x12xbf16>
    %4 = vector.extract_strided_slice %3 {offsets = [0, 0, 0], sizes = [8, 16, 12], strides = [1, 1, 1]} : vector<8x18x12xbf16> to vector<8x16x12xbf16>
    %5 = vector.extract_strided_slice %3 {offsets = [0, 1, 0], sizes = [8, 16, 12], strides = [1, 1, 1]} : vector<8x18x12xbf16> to vector<8x16x12xbf16>
    %6 = vector.extract_strided_slice %3 {offsets = [0, 2, 0], sizes = [8, 16, 12], strides = [1, 1, 1]} : vector<8x18x12xbf16> to vector<8x16x12xbf16>
    %7 = tpu.concatenate %4, %5, %6 in 2 : vector<8x16x12xbf16>, vector<8x16x12xbf16>, vector<8x16x12xbf16> -> vector<8x16x36xbf16>
    %8 = vector.shape_cast %7 : vector<8x16x36xbf16> to vector<128x36xbf16>
    %c0_3 = arith.constant 0 : index
    %c0_4 = arith.constant 0 : index
    %9 = vector.load %arg2[%c0_3, %c0_4] : memref<36x128xbf16, #tpu.memory_space<vmem>>, vector<36x128xbf16>
    %cst = arith.constant dense<0.000000e+00> : vector<128x128xf32>
    %10 = tpu.matmul %8, %9, %cst {dimension_numbers = #tpu.dot_dimension_numbers<[1], [0], [0], [1], [0, 0, 1, 1], [], []>} : vector<128x36xbf16>, vector<36x128xbf16>, vector<128x128xf32> -> vector<128x128xf32>
    %c0_5 = arith.constant 0 : index
    %c0_6 = arith.constant 0 : index
    %11 = vector.load %arg3[%c0_5, %c0_6] : memref<1x128xf32, #tpu.memory_space<vmem>>, vector<1x128xf32>
    %cst_7 = arith.constant dense<0.000000e+00> : vector<128xf32>
    %12 = vector.multi_reduction <add>, %10, %cst_7 [0] : vector<128x128xf32> to vector<128xf32>
    %13 = vector.shape_cast %12 : vector<128xf32> to vector<1x128xf32>
    %14 = arith.addf %11, %13 : vector<1x128xf32>
    %c0_8 = arith.constant 0 : index
    %c0_9 = arith.constant 0 : index
    %15 = vector.load %arg3[%c0_8, %c0_9] : memref<1x128xf32, #tpu.memory_space<vmem>>, vector<1x128xf32>
    tpu.vector_store %arg3[%c0_8, %c0_9], %14 {strides = array<i32>} : memref<1x128xf32, #tpu.memory_space<vmem>>, vector<1x128xf32>,
    %c0_10 = arith.constant 0 : index
    %c0_11 = arith.constant 0 : index
    %16 = vector.load %arg4[%c0_10, %c0_11] : memref<1x128xf32, #tpu.memory_space<vmem>>, vector<1x128xf32>
    %17 = arith.mulf %10, %10 : vector<128x128xf32>
    %cst_12 = arith.constant dense<0.000000e+00> : vector<128xf32>
    %18 = vector.multi_reduction <add>, %17, %cst_12 [0] : vector<128x128xf32> to vector<128xf32>
    %19 = vector.shape_cast %18 : vector<128xf32> to vector<1x128xf32>
    %20 = arith.addf %16, %19 : vector<1x128xf32>
    %c0_13 = arith.constant 0 : index
    %c0_14 = arith.constant 0 : index
    %21 = vector.load %arg4[%c0_13, %c0_14] : memref<1x128xf32, #tpu.memory_space<vmem>>, vector<1x128xf32>
    tpu.vector_store %arg4[%c0_13, %c0_14], %20 {strides = array<i32>} : memref<1x128xf32, #tpu.memory_space<vmem>>, vector<1x128xf32>,
    return
  }
  func.func @transform_0(%arg0: i32) -> (i32, i32, i32) {
    %c0_i32 = arith.constant 0 : i32
    %c0_i32_0 = arith.constant 0 : i32
    %c0_i32_1 = arith.constant 0 : i32
    return %arg0, %c0_i32, %c0_i32_0 : i32, i32, i32
  }
  func.func @transform_1(%arg0: i32) -> (i32, i32) {
    %c0_i32 = arith.constant 0 : i32
    %c0_i32_0 = arith.constant 0 : i32
    %c0_i32_1 = arith.constant 0 : i32
    return %c0_i32, %c0_i32_0 : i32, i32
  }
  func.func @transform_2(%arg0: i32) -> (i32, i32) {
    %c0_i32 = arith.constant 0 : i32
    %c0_i32_0 = arith.constant 0 : i32
    %c0_i32_1 = arith.constant 0 : i32
    return %c0_i32, %c0_i32_0 : i32, i32
  }
  func.func @transform_3(%arg0: i32) -> (i32, i32) {
    %c0_i32 = arith.constant 0 : i32
    %c0_i32_0 = arith.constant 0 : i32
    %c0_i32_1 = arith.constant 0 : i32
    return %c0_i32, %c0_i32_0 : i32, i32
  }
}

</mosaic_0001>

<llo_original>
// kernel: tpu_custom_call.1
$region0: #{tpu_custom_call.1}
  #allocation0 [shape = 'u32[]', space=smem, size = 0x4, offset = 0x4, fixed_abs, tag = 'smem constant byte address 0x4 - core index']
  #allocation1 [shape = 'u32[144,128]{1,0:T(1,128)}', space=vmem, size = 0x12000, scoped, tag = 'internal scratch']
  %s0 = inlined_call_operand.vmem [shape: bf16[32,18,12], index: 0, kind: input, shape index: {}]
  %s1 = inlined_call_operand.vmem [shape: bf16[36,128], index: 1, kind: input, shape index: {}]
  %s2 = inlined_call_operand.hbm [shape: f32[1,128], index: 2, kind: output, shape index: {0}]
  %s3 = inlined_call_operand.hbm [shape: f32[1,128], index: 3, kind: output, shape index: {1}]
  %4 = xla_tuple %s2, %s3
  %s5 = sld [smem:[#allocation0]]
  $region53: #{tpu_custom_call.1} parent=0
    _
  %s7 = ssub.s32 1, %s5
  %s8 = scalar_select 0, %s7, %s5
  $region1: #{tpu_custom_call.1} parent=0
    #allocation2 [shape = 'u8[512]{0}', space=vmem, size = 0x400, scoped, tag = 'output window, operand 0, single buffered']
    #allocation3 [shape = 's32[2]{0}', space=sflag, size = 0x8, scoped, tag = 'scoped memory for tpu_custom_call.1']
    #allocation4 [shape = 'u8[512]{0}', space=vmem, size = 0x400, scoped, tag = 'output window, operand 1, single buffered']
    #allocation5 [shape = 's32[1]{0}', space=sflag, size = 0x4, scoped, tag = 'scoped memory for tpu_custom_call.1']
    %9 = vsyncpa [#allocation3], 0
    %10 = vsyncpa [#allocation5], 0
    loop: start=0, step=1, limit=6
    $region2: #{tpu_custom_call.1} parent=1 // loop_pre_header
      _
    $region3: #{tpu_custom_call.1} parent=1 // loop_header
      %s12 = sphi 0, %s16
      %p13 = scmp.ge.s32.totalorder %s12, 6
      %s22 = sphi 0, %s24
      %s25 = sphi 0, %s22
      %s26 = sphi 0, %s25
      %s42 = sphi 0, %s26
      %s46 = sphi 0, %s46
      %s48 = sphi 0, %s46
      %s49 = sphi 0, %s48
      %s63 = sphi 0, %s49
      %s67 = sphi 0, %s67
      %s69 = sphi 0, %s67
      %s70 = sphi 0, %s69
      %s84 = sphi 0, %s70
      %s88 = sphi 0, %s88
      %s90 = sphi 0, %s88
      %s91 = sphi 0, %s90
      %s105 = sphi 0, %s91
    $region4: #{tpu_custom_call.1} parent=1 // loop_header_branch
      %15 = sbr.rel (%p13) target = $region8
    $region5: #{tpu_custom_call.1} parent=1 // loop_body
      %s17 = ssub.s32 %s12, 1
      %s18 = ssub.s32 %s12, 2
      %s19 = sadd.s32 %s12, 1
      %s20 = ssub.s32 %s12, %s19
      %p21 = scmp.eq.s32.totalorder %s20, 0
      %s23 = sadd.s32 %s22, 1
      %s24 = scalar_select %p21, %s22, %s23
      %p27 = pneg %p21
      %p28 = scmp.eq.s32.totalorder %s12, 3
      %p29 = por %p27, %p28
      %p30 = scmp.ne.s32.totalorder %s22, %s25
      %p31 = scmp.eq.s32.totalorder %s12, 0
      %p32 = por %p30, %p31
      %p33 = scmp.ne.s32.totalorder %s22, %s25
      %p34 = scmp.eq.s32.totalorder %s17, 3
      %p35 = por %p33, %p34
      %p36 = scmp.ne.s32.totalorder %s25, %s26
      %p37 = scmp.eq.s32.totalorder %s17, 0
      %p38 = por %p36, %p37
      %p39 = scmp.ne.s32.totalorder %s25, %s26
      %p40 = scmp.eq.s32.totalorder %s18, 3
      %p41 = por %p39, %p40
      %p43 = scmp.ne.s32.totalorder %s26, %s42
      %p44 = scmp.eq.s32.totalorder %s18, 0
      %p45 = por %p43, %p44
      %s47 = sadd.s32 %s46, 1
      %p50 = scmp.eq.s32.totalorder %s12, 3
      %p51 = scmp.ne.s32.totalorder %s46, %s48
      %p52 = scmp.eq.s32.totalorder %s12, 0
      %p53 = por %p51, %p52
      %p54 = scmp.ne.s32.totalorder %s46, %s48
      %p55 = scmp.eq.s32.totalorder %s17, 3
      %p56 = por %p54, %p55
      %p57 = scmp.ne.s32.totalorder %s48, %s49
      %p58 = scmp.eq.s32.totalorder %s17, 0
      %p59 = por %p57, %p58
      %p60 = scmp.ne.s32.totalorder %s48, %s49
      %p61 = scmp.eq.s32.totalorder %s18, 3
      %p62 = por %p60, %p61
      %p64 = scmp.ne.s32.totalorder %s49, %s63
      %p65 = scmp.eq.s32.totalorder %s18, 0
      %p66 = por %p64, %p65
      %s68 = sadd.s32 %s67, 1
      %p71 = scmp.eq.s32.totalorder %s12, 3
      %p72 = scmp.ne.s32.totalorder %s67, %s69
      %p73 = scmp.eq.s32.totalorder %s12, 0
      %p74 = por %p72, %p73
      %p75 = scmp.ne.s32.totalorder %s67, %s69
      %p76 = scmp.eq.s32.totalorder %s17, 3
      %p77 = por %p75, %p76
      %p78 = scmp.ne.s32.totalorder %s69, %s70
      %p79 = scmp.eq.s32.totalorder %s17, 0
      %p80 = por %p78, %p79
      %p81 = scmp.ne.s32.totalorder %s69, %s70
      %p82 = scmp.eq.s32.totalorder %s18, 3
      %p83 = por %p81, %p82
      %p85 = scmp.ne.s32.totalorder %s70, %s84
      %p86 = scmp.eq.s32.totalorder %s18, 0
      %p87 = por %p85, %p86
      %s89 = sadd.s32 %s88, 1
      %p92 = scmp.eq.s32.totalorder %s12, 3
      %p93 = scmp.ne.s32.totalorder %s88, %s90
      %p94 = scmp.eq.s32.totalorder %s12, 0
      %p95 = por %p93, %p94
      %p96 = scmp.ne.s32.totalorder %s88, %s90
      %p97 = scmp.eq.s32.totalorder %s17, 3
      %p98 = por %p96, %p97
      %p99 = scmp.ne.s32.totalorder %s90, %s91
      %p100 = scmp.eq.s32.totalorder %s17, 0
      %p101 = por %p99, %p100
      %p102 = scmp.ne.s32.totalorder %s90, %s91
      %p103 = scmp.eq.s32.totalorder %s18, 3
      %p104 = por %p102, %p103
      %p106 = scmp.ne.s32.totalorder %s91, %s105
      %p107 = scmp.eq.s32.totalorder %s18, 0
      %p108 = por %p106, %p107
      %p109 = scmp.le.s32.totalorder 1, %s12
      %p110 = scmp.lt.s32.totalorder %s12, 5
      %p111 = pnand %p109, %p110
      %p112 = pneg %p111
      // Predicated region
      $region9: #{tpu_custom_call.1} parent=5 // pred_check
        _
      $region10: #{tpu_custom_call.1} parent=5 // pred_check_branch
        %114 = sbr.rel (%p111) target = $region12
      $region11: #{tpu_custom_call.1} parent=5 // pred_region
        %s115 = ssub.s32 %s12, 1
        // Predicated region
        $region13: #{tpu_custom_call.1} parent=11 // pred_check
          %p116 = pneg %p59
        $region14: #{tpu_custom_call.1} parent=11 // pred_check_branch
          %118 = sbr.rel (%p116) target = $region16
        $region15: #{tpu_custom_call.1} parent=11 // pred_region
          _
        $region16: #{tpu_custom_call.1} parent=11 // pred_fallthru
          _
      $region12: #{tpu_custom_call.1} parent=5 // pred_fallthru
        _
      %p119 = scmp.lt.s32.totalorder %s12, 4
      // Predicated region
      $region17: #{tpu_custom_call.1} parent=5 // pred_check
        %p120 = pneg %p119
      $region18: #{tpu_custom_call.1} parent=5 // pred_check_branch
        %122 = sbr.rel (%p120) target = $region20
      $region19: #{tpu_custom_call.1} parent=5 // pred_region
        // Predicated region
        $region21: #{tpu_custom_call.1} parent=19 // pred_check
          %p123 = pneg %p32
        $region22: #{tpu_custom_call.1} parent=19 // pred_check_branch
          %125 = sbr.rel (%p123) target = $region24
        $region23: #{tpu_custom_call.1} parent=19 // pred_region
          %s126 = smul.u32 8, %s12
          %p127 = scmp.lt.s32.totalorder %s126, 31
          %s128 = scalar_select %p127, %s126, 31
          %s129 = smul.addr %s128, 3
          %s130 = smul.addr %s129, 4
          %s131 = scalar_lea.vmem %s0, %s130
          %s132 = smul.u32 8, %s12
        $region24: #{tpu_custom_call.1} parent=19 // pred_fallthru
          _
      $region20: #{tpu_custom_call.1} parent=5 // pred_fallthru
        _
      %p133 = scmp.le.s32.totalorder 1, %s12
      %p134 = scmp.lt.s32.totalorder %s12, 5
      %p135 = pnand %p133, %p134
      %p136 = pneg %p135
      // Predicated region
      $region25: #{tpu_custom_call.1} parent=5 // pred_check
        _
      $region26: #{tpu_custom_call.1} parent=5 // pred_check_branch
        %138 = sbr.rel (%p135) target = $region28
      $region27: #{tpu_custom_call.1} parent=5 // pred_region
        %s139 = ssub.s32 %s12, 1
        %s140 = smul.u32 8, %s17
        %p141 = scmp.lt.s32.totalorder %s140, 31
        %s142 = scalar_select %p141, %s140, 31
        %s143 = smul.addr %s142, 3
        %s144 = smul.addr %s143, 4
        %s145 = scalar_lea.vmem %s0, %s144
        %p146 = pneg %p38
        %p147 = pneg %p35
        %p148 = pneg %p59
        %p149 = pneg %p56
        %p150 = pneg %p80
        %p151 = pneg %p77
        %p152 = pneg %p101
        %p153 = pneg %p98
        %s154 = smul.u32 8, %s17
        %p155 = scmp.lt.s32.totalorder %s154, 31
        %s156 = scalar_select %p155, %s154, 31
        %s157 = smul.addr %s156, 3
        %s158 = smul.addr %s157, 4
        %s159 = scalar_lea.vmem %s0, %s158
        %s160 = smul.u32 8, %s17
        %p162 = scmp.eq.s32.totalorder %s17, 0
        // Predicated region
        $region29: #{tpu_custom_call.1} parent=27 // pred_check
          %p163 = pneg %p162
        $region30: #{tpu_custom_call.1} parent=27 // pred_check_branch
          %165 = sbr.rel (%p163) target = $region32
        $region31: #{tpu_custom_call.1} parent=27 // pred_region
          %166 = vst [vmem:[#allocation2] sm:$0x1] 0.0
          %167 = vst [vmem:[#allocation4] sm:$0x1] 0.0
        $region32: #{tpu_custom_call.1} parent=27 // pred_fallthru
          _
        %v168 = vld [vmem:[%s159] sm:$0xf]
        %v169 = vld [vmem:[%s159 + $0x4] sm:$0xf]
        %v170 = vld [vmem:[%s159 + $0x8] sm:$0x1]
        %v171 = vld [vmem:[%s159 + $0xc] sm:$0xf]
        %v172 = vld [vmem:[%s159 + $0x10] sm:$0xf]
        %v173 = vld [vmem:[%s159 + $0x14] sm:$0x1]
        %v174 = vld [vmem:[%s159 + $0x18] sm:$0xf]
        %v175 = vld [vmem:[%s159 + $0x1c] sm:$0xf]
        %v176 = vld [vmem:[%s159 + $0x20] sm:$0x1]
        %v177 = vld [vmem:[%s159 + $0x24] sm:$0xf]
        %v178 = vld [vmem:[%s159 + $0x28] sm:$0xf]
        %v179 = vld [vmem:[%s159 + $0x2c] sm:$0x1]
        %v180 = vld [vmem:[%s159 + $0x30] sm:$0xf]
        %v181 = vld [vmem:[%s159 + $0x34] sm:$0xf]
        %v182 = vld [vmem:[%s159 + $0x38] sm:$0x1]
        %v183 = vld [vmem:[%s159 + $0x3c] sm:$0xf]
        %v184 = vld [vmem:[%s159 + $0x40] sm:$0xf]
        %v185 = vld [vmem:[%s159 + $0x44] sm:$0x1]
        %v186 = vld [vmem:[%s159 + $0x48] sm:$0xf]
        %v187 = vld [vmem:[%s159 + $0x4c] sm:$0xf]
        %v188 = vld [vmem:[%s159 + $0x50] sm:$0x1]
        %v189 = vld [vmem:[%s159 + $0x54] sm:$0xf]
        %v190 = vld [vmem:[%s159 + $0x58] sm:$0xf]
        %v191 = vld [vmem:[%s159 + $0x5c] sm:$0x1]
        %v208 = vunpack.c.l.b16 %v168
        %v209 = vunpack.c.l.b16 %v169
        %v210 = vunpack.c.l.b16 %v171
        %v211 = vunpack.c.l.b16 %v172
        %v212 = vunpack.c.l.b16 %v174
        %v213 = vunpack.c.l.b16 %v175
        %v214 = vunpack.c.l.b16 %v177
        %v215 = vunpack.c.l.b16 %v178
        %v216 = vunpack.c.l.b16 %v180
        %v217 = vunpack.c.l.b16 %v181
        %v218 = vunpack.c.l.b16 %v183
        %v219 = vunpack.c.l.b16 %v184
        %v220 = vunpack.c.l.b16 %v186
        %v221 = vunpack.c.l.b16 %v187
        %v222 = vunpack.c.l.b16 %v189
        %v223 = vunpack.c.l.b16 %v190
        %v224 = vpack.c.b16 %v209, %v208
        %v225 = vpack.c.b16 %v211, %v210
        %v226 = vpack.c.b16 %v213, %v212
        %v227 = vpack.c.b16 %v215, %v214
        %v228 = vpack.c.b16 %v217, %v216
        %v229 = vpack.c.b16 %v219, %v218
        %v230 = vpack.c.b16 %v221, %v220
        %v231 = vpack.c.b16 %v223, %v222
        %v240 = vunpack.c.l.b16 %v170
        %v241 = vunpack.c.l.b16 %v173
        %v242 = vunpack.c.l.b16 %v176
        %v243 = vunpack.c.l.b16 %v179
        %v244 = vunpack.c.l.b16 %v182
        %v245 = vunpack.c.l.b16 %v185
        %v246 = vunpack.c.l.b16 %v188
        %v247 = vunpack.c.l.b16 %v191
        %v248 = vpack.c.b16 %v240, %v240
        %v249 = vpack.c.b16 %v241, %v241
        %v250 = vpack.c.b16 %v242, %v242
        %v251 = vpack.c.b16 %v243, %v243
        %v252 = vpack.c.b16 %v244, %v244
        %v253 = vpack.c.b16 %v245, %v245
        %v254 = vpack.c.b16 %v246, %v246
        %v255 = vpack.c.b16 %v247, %v247
        %vm256 = vsmask.f32 7424
        %v258 = vshrl.u32 %v224, 16
        %v260 = vshll.u32 %v224, 16
        %v262 = vrot.slane %v260, 1
        %v263 = vor.u32 %v258, %v262
        %v265 = vshll.u32 %v248, 16
        %v267 = vrot.slane %v265, 1
        %v268 = vsel %vm256, %v263, %v267
        %v270 = vshrl.u32 %v225, 16
        %v272 = vshll.u32 %v225, 16
        %v274 = vrot.slane %v272, 1
        %v275 = vor.u32 %v270, %v274
        %v277 = vshll.u32 %v249, 16
        %v279 = vrot.slane %v277, 1
        %v280 = vsel %vm256, %v275, %v279
        %v282 = vshrl.u32 %v226, 16
        %v284 = vshll.u32 %v226, 16
        %v286 = vrot.slane %v284, 1
        %v287 = vor.u32 %v282, %v286
        %v289 = vshll.u32 %v250, 16
        %v291 = vrot.slane %v289, 1
        %v292 = vsel %vm256, %v287, %v291
        %v294 = vshrl.u32 %v227, 16
        %v296 = vshll.u32 %v227, 16
        %v298 = vrot.slane %v296, 1
        %v299 = vor.u32 %v294, %v298
        %v301 = vshll.u32 %v251, 16
        %v303 = vrot.slane %v301, 1
        %v304 = vsel %vm256, %v299, %v303
        %v306 = vshrl.u32 %v228, 16
        %v308 = vshll.u32 %v228, 16
        %v310 = vrot.slane %v308, 1
        %v311 = vor.u32 %v306, %v310
        %v313 = vshll.u32 %v252, 16
        %v315 = vrot.slane %v313, 1
        %v316 = vsel %vm256, %v311, %v315
        %v318 = vshrl.u32 %v229, 16
        %v320 = vshll.u32 %v229, 16
        %v322 = vrot.slane %v320, 1
        %v323 = vor.u32 %v318, %v322
        %v325 = vshll.u32 %v253, 16
        %v327 = vrot.slane %v325, 1
        %v328 = vsel %vm256, %v323, %v327
        %v330 = vshrl.u32 %v230, 16
        %v332 = vshll.u32 %v230, 16
        %v334 = vrot.slane %v332, 1
        %v335 = vor.u32 %v330, %v334
        %v337 = vshll.u32 %v254, 16
        %v339 = vrot.slane %v337, 1
        %v340 = vsel %vm256, %v335, %v339
        %v342 = vshrl.u32 %v231, 16
        %v344 = vshll.u32 %v231, 16
        %v346 = vrot.slane %v344, 1
        %v347 = vor.u32 %v342, %v346
        %v349 = vshll.u32 %v255, 16
        %v351 = vrot.slane %v349, 1
        %v352 = vsel %vm256, %v347, %v351
        %353 = vrot.lane.b32.xlu0 %v268, 12
        %v354 = vpop.permute.xlu0 %353
        %355 = vrot.lane.b32.xlu0 %v280, 12
        %v356 = vpop.permute.xlu0 %355
        %357 = vrot.lane.b32.xlu0 %v292, 12
        %v358 = vpop.permute.xlu0 %357
        %359 = vrot.lane.b32.xlu0 %v304, 12
        %v360 = vpop.permute.xlu0 %359
        %361 = vrot.lane.b32.xlu0 %v316, 12
        %v362 = vpop.permute.xlu0 %361
        %363 = vrot.lane.b32.xlu0 %v328, 12
        %v364 = vpop.permute.xlu0 %363
        %365 = vrot.lane.b32.xlu0 %v340, 12
        %v366 = vpop.permute.xlu0 %365
        %367 = vrot.lane.b32.xlu0 %v352, 12
        %v368 = vpop.permute.xlu0 %367
        %vm369 = vcmask 1046528
        %v370 = vrot.slane %v224, 1
        %v371 = vrot.slane %v248, 1
        %v372 = vsel %vm369, %v370, %v371
        %v373 = vrot.slane %v225, 1
        %v374 = vrot.slane %v249, 1
        %v375 = vsel %vm369, %v373, %v374
        %v376 = vrot.slane %v226, 1
        %v377 = vrot.slane %v250, 1
        %v378 = vsel %vm369, %v376, %v377
        %v379 = vrot.slane %v227, 1
        %v380 = vrot.slane %v251, 1
        %v381 = vsel %vm369, %v379, %v380
        %v382 = vrot.slane %v228, 1
        %v383 = vrot.slane %v252, 1
        %v384 = vsel %vm369, %v382, %v383
        %v385 = vrot.slane %v229, 1
        %v386 = vrot.slane %v253, 1
        %v387 = vsel %vm369, %v385, %v386
        %v388 = vrot.slane %v230, 1
        %v389 = vrot.slane %v254, 1
        %v390 = vsel %vm369, %v388, %v389
        %v391 = vrot.slane %v231, 1
        %v392 = vrot.slane %v255, 1
        %v393 = vsel %vm369, %v391, %v392
        %394 = vrot.lane.b32.xlu0 %v372, 24
        %v395 = vpop.permute.xlu0 %394
        %396 = vrot.lane.b32.xlu0 %v375, 24
        %v397 = vpop.permute.xlu0 %396
        %398 = vrot.lane.b32.xlu0 %v378, 24
        %v399 = vpop.permute.xlu0 %398
        %400 = vrot.lane.b32.xlu0 %v381, 24
        %v401 = vpop.permute.xlu0 %400
        %402 = vrot.lane.b32.xlu0 %v384, 24
        %v403 = vpop.permute.xlu0 %402
        %404 = vrot.lane.b32.xlu0 %v387, 24
        %v405 = vpop.permute.xlu0 %404
        %406 = vrot.lane.b32.xlu0 %v390, 24
        %v407 = vpop.permute.xlu0 %406
        %408 = vrot.lane.b32.xlu0 %v393, 24
        %v409 = vpop.permute.xlu0 %408
        %vm410 = vcmask 97280
        %v412 = vsel %vm410, %v224, %v354
        %v414 = vsel %vm410, %v225, %v356
        %v416 = vsel %vm410, %v226, %v358
        %v418 = vsel %vm410, %v227, %v360
        %v420 = vsel %vm410, %v228, %v362
        %v422 = vsel %vm410, %v229, %v364
        %v424 = vsel %vm410, %v230, %v366
        %v426 = vsel %vm410, %v231, %v368
        %vm427 = vcmask 195584
        %v429 = vsel %vm427, %v412, %v395
        %v431 = vsel %vm427, %v414, %v397
        %v433 = vsel %vm427, %v416, %v399
        %v435 = vsel %vm427, %v418, %v401
        %v437 = vsel %vm427, %v420, %v403
        %v439 = vsel %vm427, %v422, %v405
        %v441 = vsel %vm427, %v424, %v407
        %v443 = vsel %vm427, %v426, %v409
        %v444 = vld [vmem:[%s1] sm:$0xf]
        %v445 = vld [vmem:[%s1 + $0x4] sm:$0xf]
        %v446 = vld [vmem:[%s1 + $0x8] sm:$0xf]
        %v447 = vld [vmem:[%s1 + $0xc] sm:$0xf]
        %v448 = vld [vmem:[%s1 + $0x10] sm:$0x3]
        %v454 = vunpack.c.l.b16 %v444
        %v455 = vunpack.c.l.b16 %v445
        %v456 = vunpack.c.l.b16 %v446
        %v457 = vunpack.c.l.b16 %v447
        %v458 = vunpack.c.l.b16 %v448
        %v459 = vpack.c.b16 %v455, %v454
        %v460 = vpack.c.b16 %v457, %v456
        %v461 = vpack.c.b16 %v458, %v458
        %vm464 = vcmask 293888
        %v465 = vsel %vm464, %v429, 0
        %v467 = vsel %vm464, %v431, 0
        %v469 = vsel %vm464, %v433, 0
        %v471 = vsel %vm464, %v435, 0
        %v473 = vsel %vm464, %v437, 0
        %v475 = vsel %vm464, %v439, 0
        %v477 = vsel %vm464, %v441, 0
        %v479 = vsel %vm464, %v443, 0
        %vm481 = vcmask 1041408
        %v483 = vsel %vm481, %v461, 0
        %485 = vmatprep.subr.bf16.mxu0 0
        %486 = vmatpush1.bf16.msra.mxu0 %v459
        %487 = vmatprep.subr.bf16.mxu0 0
        %488 = vmatpush1.bf16.msra.mxu0 %v460
        %489 = vmatprep.subr.bf16.mxu0 0
        %490 = vmatpush1.bf16.msra.mxu0 %v483
        %491 = vmatprep.subr.bf16.mxu0 0
        %492 = vmatpush1.bf16.msra.mxu0 0
        %493 = vmatprep.subr.bf16.mxu0 0
        %494 = vmatpush1.bf16.msra.mxu0 0
        %495 = vmatprep.subr.bf16.mxu0 0
        %496 = vmatpush1.bf16.msra.mxu0 0
        %497 = vmatprep.subr.bf16.mxu0 0
        %498 = vmatpush1.bf16.msra.mxu0 0
        %499 = vmatprep.subr.bf16.mxu0 0
        %500 = vmatpush1.bf16.msra.mxu0 0
        %501 = vmatprep.subr.bf16.mxu0 0
        %502 = vmatpush1.bf16.msra.mxu0 0
        %503 = vmatprep.subr.bf16.mxu0 0
        %504 = vmatpush1.bf16.msra.mxu0 0
        %505 = vmatprep.subr.bf16.mxu0 0
        %506 = vmatpush1.bf16.msra.mxu0 0
        %507 = vmatprep.subr.bf16.mxu0 0
        %508 = vmatpush1.bf16.msra.mxu0 0
        %509 = vmatprep.subr.bf16.mxu0 0
        %510 = vmatpush1.bf16.msra.mxu0 0
        %511 = vmatprep.subr.bf16.mxu0 0
        %512 = vmatpush1.bf16.msra.mxu0 0
        %513 = vmatprep.subr.bf16.mxu0 0
        %514 = vmatpush1.bf16.msra.mxu0 0
        %515 = vmatprep.subr.bf16.mxu0 0
        %516 = vmatpush1.bf16.msra.mxu0 0
        %517 = vmatprep.mubr.bf16.mxu0 0
        %518 = vmatmul.mubr.bf16.gmra.mrb[0].mxu0 %v465
        %v519 = vpop.f32.mrb[0].mxu0
        %v520 = vadd.f32 0.0, %v519
        %v521 = vpop.f32.mrb[0].mxu0
        %v522 = vpop.f32.mrb[0].mxu0
        %v523 = vadd.f32 0.0, %v522
        %v524 = vpop.f32.mrb[0].mxu0
        %525 = vmatprep.mubr.bf16.mxu0 0
        %526 = vmatmul.mubr.bf16.gmra.mrb[0].mxu0 %v467
        %v527 = vpop.f32.mrb[0].mxu0
        %v528 = vadd.f32 0.0, %v527
        %v529 = vpop.f32.mrb[0].mxu0
        %v530 = vpop.f32.mrb[0].mxu0
        %v531 = vadd.f32 0.0, %v530
        %v532 = vpop.f32.mrb[0].mxu0
        %533 = vmatprep.mubr.bf16.mxu0 0
        %534 = vmatmul.mubr.bf16.gmra.mrb[0].mxu0 %v469
        %v535 = vpop.f32.mrb[0].mxu0
        %v536 = vadd.f32 0.0, %v535
        %v537 = vpop.f32.mrb[0].mxu0
        %v538 = vpop.f32.mrb[0].mxu0
        %v539 = vadd.f32 0.0, %v538
        %v540 = vpop.f32.mrb[0].mxu0
        %541 = vmatprep.mubr.bf16.mxu0 0
        %542 = vmatmul.mubr.bf16.gmra.mrb[0].mxu0 %v471
        %v543 = vpop.f32.mrb[0].mxu0
        %v544 = vadd.f32 0.0, %v543
        %v545 = vpop.f32.mrb[0].mxu0
        %v546 = vpop.f32.mrb[0].mxu0
        %v547 = vadd.f32 0.0, %v546
        %v548 = vpop.f32.mrb[0].mxu0
        %549 = vmatprep.mubr.bf16.mxu0 0
        %550 = vmatmul.mubr.bf16.gmra.mrb[0].mxu0 %v473
        %v551 = vpop.f32.mrb[0].mxu0
        %v552 = vadd.f32 0.0, %v551
        %v553 = vpop.f32.mrb[0].mxu0
        %v554 = vpop.f32.mrb[0].mxu0
        %v555 = vadd.f32 0.0, %v554
        %v556 = vpop.f32.mrb[0].mxu0
        %557 = vmatprep.mubr.bf16.mxu0 0
        %558 = vmatmul.mubr.bf16.gmra.mrb[0].mxu0 %v475
        %v559 = vpop.f32.mrb[0].mxu0
        %v560 = vadd.f32 0.0, %v559
        %v561 = vpop.f32.mrb[0].mxu0
        %v562 = vpop.f32.mrb[0].mxu0
        %v563 = vadd.f32 0.0, %v562
        %v564 = vpop.f32.mrb[0].mxu0
        %565 = vmatprep.mubr.bf16.mxu0 0
        %566 = vmatmul.mubr.bf16.gmra.mrb[0].mxu0 %v477
        %v567 = vpop.f32.mrb[0].mxu0
        %v568 = vadd.f32 0.0, %v567
        %v569 = vpop.f32.mrb[0].mxu0
        %v570 = vpop.f32.mrb[0].mxu0
        %v571 = vadd.f32 0.0, %v570
        %v572 = vpop.f32.mrb[0].mxu0
        %573 = vmatprep.mubr.bf16.mxu0 0
        %574 = vmatmul.mubr.bf16.gmra.mrb[0].mxu0 %v479
        %v575 = vpop.f32.mrb[0].mxu0
        %v576 = vadd.f32 0.0, %v575
        %v577 = vpop.f32.mrb[0].mxu0
        %v578 = vpop.f32.mrb[0].mxu0
        %v579 = vadd.f32 0.0, %v578
        %v580 = vpop.f32.mrb[0].mxu0
        %581 = vdwg.mxu0
        %v582 = vld [vmem:[#allocation2] sm:$0x1]
        %v583 = vadd.f32 %v520, %v523
        %v584 = vadd.f32 %v583, %v528
        %v585 = vadd.f32 %v584, %v531
        %v586 = vadd.f32 %v585, %v536
        %v587 = vadd.f32 %v586, %v539
        %v588 = vadd.f32 %v587, %v544
        %v589 = vadd.f32 %v588, %v547
        %v590 = vadd.f32 %v589, %v552
        %v591 = vadd.f32 %v590, %v555
        %v592 = vadd.f32 %v591, %v560
        %v593 = vadd.f32 %v592, %v563
        %v594 = vadd.f32 %v593, %v568
        %v595 = vadd.f32 %v594, %v571
        %v596 = vadd.f32 %v595, %v576
        %v597 = vadd.f32 %v596, %v579
        %v598 = vrot.slane %v597, 4
        %v599 = vadd.f32 %v597, %v598
        %v600 = vrot.slane %v599, 2
        %v601 = vadd.f32 %v599, %v600
        %v602 = vrot.slane %v601, 1
        %v603 = vadd.f32 %v601, %v602
        %v604 = vadd.f32 %v582, %v603
        %605 = vst [vmem:[#allocation2] sm:$0x1] %v604
        %v606 = vld [vmem:[#allocation4] sm:$0x1]
        %v607 = vmul.f32 %v520, %v520
        %v608 = vmul.f32 %v523, %v523
        %v609 = vmul.f32 %v528, %v528
        %v610 = vmul.f32 %v531, %v531
        %v611 = vmul.f32 %v536, %v536
        %v612 = vmul.f32 %v539, %v539
        %v613 = vmul.f32 %v544, %v544
        %v614 = vmul.f32 %v547, %v547
        %v615 = vmul.f32 %v552, %v552
        %v616 = vmul.f32 %v555, %v555
        %v617 = vmul.f32 %v560, %v560
        %v618 = vmul.f32 %v563, %v563
        %v619 = vmul.f32 %v568, %v568
        %v620 = vmul.f32 %v571, %v571
        %v621 = vmul.f32 %v576, %v576
        %v622 = vmul.f32 %v579, %v579
        %v623 = vadd.f32 %v607, %v608
        %v624 = vadd.f32 %v623, %v609
        %v625 = vadd.f32 %v624, %v610
        %v626 = vadd.f32 %v625, %v611
        %v627 = vadd.f32 %v626, %v612
        %v628 = vadd.f32 %v627, %v613
        %v629 = vadd.f32 %v628, %v614
        %v630 = vadd.f32 %v629, %v615
        %v631 = vadd.f32 %v630, %v616
        %v632 = vadd.f32 %v631, %v617
        %v633 = vadd.f32 %v632, %v618
        %v634 = vadd.f32 %v633, %v619
        %v635 = vadd.f32 %v634, %v620
        %v636 = vadd.f32 %v635, %v621
        %v637 = vadd.f32 %v636, %v622
        %v638 = vrot.slane %v637, 4
        %v639 = vadd.f32 %v637, %v638
        %v640 = vrot.slane %v639, 2
        %v641 = vadd.f32 %v639, %v640
        %v642 = vrot.slane %v641, 1
        %v643 = vadd.f32 %v641, %v642
        %v644 = vadd.f32 %v606, %v643
        %645 = vst [vmem:[#allocation4] sm:$0x1] %v644
        // Predicated region
        $region33: #{tpu_custom_call.1} parent=27 // pred_check
          %p646 = pneg %p77
        $region34: #{tpu_custom_call.1} parent=27 // pred_check_branch
          %648 = sbr.rel (%p646) target = $region36
        $region35: #{tpu_custom_call.1} parent=27 // pred_region
          %s650 = ssub.s32 16, 16
          %651 = vsyncadd [#allocation3], %s650
          %s653 = sshll.u32 [#allocation2], 4
          %s654 = int_to_ptr.vmem [resolvable:$true] %s653
          %656 = dma.vmem_to_hbm [thread:$0]  %s654, 16, %s2, [#allocation3]
        $region36: #{tpu_custom_call.1} parent=27 // pred_fallthru
          _
        // Predicated region
        $region37: #{tpu_custom_call.1} parent=27 // pred_check
          %p657 = pneg %p98
        $region38: #{tpu_custom_call.1} parent=27 // pred_check_branch
          %659 = sbr.rel (%p657) target = $region40
        $region39: #{tpu_custom_call.1} parent=27 // pred_region
          %s661 = ssub.s32 16, 16
          %662 = vsyncadd [#allocation5], %s661
          %s664 = sshll.u32 [#allocation4], 4
          %s665 = int_to_ptr.vmem [resolvable:$true] %s664
          %667 = dma.vmem_to_hbm [thread:$0]  %s665, 16, %s3, [#allocation5]
        $region40: #{tpu_custom_call.1} parent=27 // pred_fallthru
          _
        // Predicated region
        $region41: #{tpu_custom_call.1} parent=27 // pred_check
          %p668 = pneg %p77
        $region42: #{tpu_custom_call.1} parent=27 // pred_check_branch
          %670 = sbr.rel (%p668) target = $region44
        $region43: #{tpu_custom_call.1} parent=27 // pred_region
          %671 = dma.done [#allocation3], 16
        $region44: #{tpu_custom_call.1} parent=27 // pred_fallthru
          _
        // Predicated region
        $region45: #{tpu_custom_call.1} parent=27 // pred_check
          %p672 = pneg %p98
        $region46: #{tpu_custom_call.1} parent=27 // pred_check_branch
          %674 = sbr.rel (%p672) target = $region48
        $region47: #{tpu_custom_call.1} parent=27 // pred_region
          %675 = dma.done [#allocation5], 16
        $region48: #{tpu_custom_call.1} parent=27 // pred_fallthru
          _
      $region28: #{tpu_custom_call.1} parent=5 // pred_fallthru
        _
      %p676 = scmp.le.s32.totalorder 2, %s12
      // Predicated region
      $region49: #{tpu_custom_call.1} parent=5 // pred_check
        %p677 = pneg %p676
      $region50: #{tpu_custom_call.1} parent=5 // pred_check_branch
        %679 = sbr.rel (%p677) target = $region52
      $region51: #{tpu_custom_call.1} parent=5 // pred_region
        %s680 = ssub.s32 %s12, 2
      $region52: #{tpu_custom_call.1} parent=5 // pred_fallthru
        _
    $region6: #{tpu_custom_call.1} parent=1 // loop_footer
      %s16 = sadd.s32 1, %s12
    $region7: #{tpu_custom_call.1} parent=1 // loop_footer_branch
      %11 = sbr.rel target = $region3
    $region8: #{tpu_custom_call.1} parent=1 // loop_exit
      _
    %681 = vsyncpa [#allocation3], 1
    %s682 = scalar_lea.sflag [#allocation3], 1
    %683 = vsyncpa %s682, 1
    %684 = vsyncpa [#allocation5], 1

</llo_original>
